<compile_context>
chip_gen: v7x
topology: tpu7x:2x2x1
jax: 0.10.0
libtpu: 0.0.40
codegen_flags: <defaults>
</compile_context>

<pallas_src>
import functools

import jax
import jax.numpy as jnp
from jax.experimental import pallas as pl
from jax.experimental.pallas import tpu as pltpu

EPS = 1e-5          # nn.InstanceNorm2d default eps
NEG_SLOPE = 0.2     # LeakyReLU negative slope


def _instance_norm(x):
    # x: (nb, C, HW) f32. Single traversal for stats (mean and E[x^2]); biased
    # variance, matching nn.InstanceNorm2d(affine=False). E[x^2]-mean^2 is
    # slightly less stable than the centered form; fine at these magnitudes.
    mean = jnp.mean(x, axis=2, keepdims=True)
    msq = jnp.mean(x * x, axis=2, keepdims=True)
    var = jnp.maximum(msq - mean * mean, 0.0)
    return (x - mean) * jax.lax.rsqrt(var + EPS)


def _leaky(x):
    return jnp.where(x > 0, x, NEG_SLOPE * x)


def _conv1x1(w, x):
    # w: (Co, Ci); x: (nb, Ci, HW) -> (nb, Co, HW) float32.
    co, ci = w.shape
    nb = x.shape[0]
    if ci * co < 2048:
        # Tiny contraction: unrolled VPU FMA per input channel. An underfilled
        # MXU pass at e.g. 4x8 is pure push/pop overhead.
        wf = w.astype(jnp.float32)
        xf = x.astype(jnp.float32)
        out = wf[None, :, 0:1] * xf[:, 0:1, :]
        for c in range(1, ci):
            out = out + wf[None, :, c:c + 1] * xf[:, c:c + 1, :]
        return out
    # MXU path: bf16 operands + f32 accumulation hits full MXU rate on
    # v5e/v6e/v7x (f32xf32 runs at a small fraction of it).
    # NOTE: bf16 operands diverge slightly from a pure-f32 reference.
    wb = w.astype(jnp.bfloat16)
    outs = [jnp.dot(wb, x[i].astype(jnp.bfloat16),
                    preferred_element_type=jnp.float32) for i in range(nb)]
    return jnp.stack(outs, axis=0)


def inverted_res_kernel(x_ref, w1_ref, wdw_ref, w2_ref, mask_ref, o_ref, *, H, W):
    HW = H * W
    x = x_ref[...]                                 # (nb, Cin, HW), native dtype
    xf = x.astype(jnp.float32)

    # --- ConvBlock: 1x1 expand conv -> InstanceNorm -> LeakyReLU ---
    t = _leaky(_instance_norm(_conv1x1(w1_ref[...], x)))   # (nb, Cb, HW) f32

    # --- 3x3 depthwise conv, stride 1, padding 1 (flat HW, lane rotations) ---
    dw = wdw_ref[...].astype(jnp.float32)          # (Cb, 9), tap k = 3*di + dj
    masks = mask_ref[...]                          # (9, HW) f32 {0,1}, precomputed
    lane_aligned = (HW % 128 == 0)

    # TODO(synk): a zero-padded VMEM scratch layout would drop the per-tap mask
    # multiply, but only pays off when the padded width stays a 128 multiple.
    acc = jnp.zeros_like(t)
    for k in range(9):
        di, dj = k // 3 - 1, k % 3 - 1
        s = di * W + dj
        if s == 0:
            shifted = t
        elif lane_aligned:
            # XLU lane rotation; frees VALU/vld slots vs jnp.roll's slice+concat.
            shifted = pltpu.roll(t, shift=(-s) % HW, axis=2)
        else:
            shifted = jnp.roll(t, -s, axis=2)
        tap = dw[:, k][None, :, None]              # (1, Cb, 1) per-channel weight
        if k == 4:                                 # center tap: mask is all-ones
            acc = acc + shifted * tap
        else:
            acc = acc + (shifted * masks[k][None, None, :]) * tap

    # --- InstanceNorm -> LeakyReLU ---
    t2 = _leaky(_instance_norm(acc))

    # --- 1x1 projection conv -> InstanceNorm -> residual add ---
    y = _instance_norm(_conv1x1(w2_ref[...], t2))  # (nb, Cout, HW) f32
    o_ref[...] = (y + xf).astype(o_ref.dtype)


def _boundary_masks(H, W):
    # Output-position validity masks for the 9 taps (zero padding). Depend only
    # on (H, W): computed once on the host side, resident in VMEM across steps.
    HW = H * W
    ri = jnp.arange(H)
    ci = jnp.arange(W)
    row_ok = {-1: ri >= 1, 0: jnp.ones((H,), jnp.bool_), 1: ri <= H - 2}
    col_ok = {-1: ci >= 1, 0: jnp.ones((W,), jnp.bool_), 1: ci <= W - 2}
    rows = []
    for k in range(9):
        di, dj = k // 3 - 1, k % 3 - 1
        m = jnp.logical_and(row_ok[di][:, None], col_ok[dj][None, :]).reshape(HW)
        rows.append(m)
    return jnp.stack(rows, axis=0).astype(jnp.float32)     # (9, HW)


def inverted_res_block(x_nchw, w1, wdw, w2):
    """x_nchw: (N, Cin, H, W); w1: (Cb, Cin); wdw: (Cb, 9); w2: (Cout, Cb)."""
    N, Cin, H, W = x_nchw.shape
    Cb = w1.shape[0]
    Cout = w2.shape[0]
    assert Cin == Cout, "residual add requires in_channels == out_channels"
    HW = H * W

    # channels-first, lane-dense: NCHW -> (N, C, H*W); pure reshape, no transpose.
    x = x_nchw.reshape(N, Cin, HW)
    itemsize = jnp.dtype(x.dtype).itemsize
    w_itemsize = jnp.dtype(w1.dtype).itemsize
    masks = _boundary_masks(H, W)

    # Generation-aware VMEM budget (v5e/v6e ~128 MiB, v7x ~64 MiB per TC).
    try:
        vmem_cap = int(pltpu.get_tpu_info().vmem_capacity_bytes)
    except Exception:                                   # pragma: no cover
        vmem_cap = 64 * 1024 * 1024
    usable = int(vmem_cap * 0.85)

    # Peak accounting: resident weights+masks, double-buffered I/O tiles, and the
    # live f32 intermediates (x kept for residual; t + acc + one shifted temp at
    # bottleneck width; projected y).
    weights_bytes = (Cb * Cin + Cb * 9 + Cout * Cb) * w_itemsize + 9 * HW * 4
    per_sample_live = (Cin * HW + 3 * Cb * HW + Cout * HW) * 4
    per_sample_io = 2 * (Cin + Cout) * HW * itemsize

    budget = max(usable - weights_bytes, per_sample_live + per_sample_io)
    nb_max = max(1, budget // (per_sample_live + per_sample_io))
    nb = 1
    for d in range(1, N + 1):                       # largest divisor of N that fits
        if N % d == 0 and d <= nb_max:
            nb = d

    peak = weights_bytes + nb * (per_sample_live + per_sample_io)
    vmem_limit = int(min(usable, max(32 * 1024 * 1024, int(1.4 * peak))))

    kernel = functools.partial(inverted_res_kernel, H=H, W=W)
    out = pl.pallas_call(
        kernel,
        out_shape=jax.ShapeDtypeStruct((N, Cout, HW), x.dtype),
        grid_spec=pltpu.PrefetchScalarGridSpec(
            num_scalar_prefetch=0,
            grid=(N // nb,),
            in_specs=[
                pl.BlockSpec((nb, Cin, HW), lambda n: (n, 0, 0)),
                pl.BlockSpec((Cb, Cin), lambda n: (0, 0)),    # weights resident
                pl.BlockSpec((Cb, 9), lambda n: (0, 0)),
                pl.BlockSpec((Cout, Cb), lambda n: (0, 0)),
                pl.BlockSpec((9, HW), lambda n: (0, 0)),      # boundary masks
            ],
            out_specs=pl.BlockSpec((nb, Cout, HW), lambda n: (n, 0, 0)),
        ),
        compiler_params=pltpu.CompilerParams(
            dimension_semantics=("parallel",),
            vmem_limit_bytes=vmem_limit,
        ),
    )(x, w1, wdw, w2, masks)

    return out.reshape(N, Cout, H, W)


def ref_forward(x_nchw, w1, wdw, w2):
    """Pure-JAX reference mirroring the PyTorch module semantics (NCHW)."""
    N, C, H, W = x_nchw.shape
    xf = x_nchw.astype(jnp.float32)

    def inorm(v):
        m = jnp.mean(v, axis=(2, 3), keepdims=True)
        d = v - m
        var = jnp.mean(d * d, axis=(2, 3), keepdims=True)
        return d * jax.lax.rsqrt(var + EPS)

    def leaky(v):
        return jnp.where(v > 0, v, NEG_SLOPE * v)

    t = jnp.einsum('nchw,dc->ndhw', xf, w1)
    t = leaky(inorm(t))
    tp = jnp.pad(t, ((0, 0), (0, 0), (1, 1), (1, 1)))
    acc = jnp.zeros_like(t)
    for k in range(9):
        di, dj = k // 3, k % 3
        acc = acc + tp[:, :, di:di + H, dj:dj + W] * wdw[:, k][None, :, None, None]
    t = leaky(inorm(acc))
    y = jnp.einsum('ndhw,ed->nehw', t, w2)
    return inorm(y) + xf


if __name__ == "__main__":
    # Small shapes: in_channels = out_channels = 4, expand_ratio = 2 -> bottleneck = 8
    N, C, H, W = 2, 4, 16, 16
    expand_ratio = 2
    Cb = round(expand_ratio * C)

    key = jax.random.PRNGKey(0)
    kx, k1, kdw, k2 = jax.random.split(key, 4)

    x = jax.random.normal(kx, (N, C, H, W), dtype=jnp.float32)

    # PyTorch conv weight layouts (bias=False), squeezed to 2-D:
    #   conv_block.conv.weight: (Cb, C, 1, 1) -> w1  (Cb, C)
    #   depth_wise.weight:      (Cb, 1, 3, 3) -> wdw (Cb, 9), row-major taps
    #   conv.weight:            (C, Cb, 1, 1) -> w2  (C, Cb)
    w1 = 0.1 * jax.random.normal(k1, (Cb, C), dtype=jnp.float32)
    wdw = 0.1 * jax.random.normal(kdw, (Cb, 9), dtype=jnp.float32)
    w2 = 0.1 * jax.random.normal(k2, (C, Cb), dtype=jnp.float32)

    out = jax.block_until_ready(inverted_res_block(x, w1, wdw, w2))
    ref = jax.block_until_ready(ref_forward(x, w1, wdw, w2))

    assert out.shape == (N, C, H, W)
    assert jnp.allclose(out, ref, rtol=1e-4, atol=1e-4), "mismatch vs reference"
    print("KERNEL_OK")
</pallas_src>

<mosaic_0001>
module attributes {stable_mosaic.version = 11 : i64} {
  func.func @inverted_res_kernel(%arg0: i32, %arg1: memref<2x4x256xf32, #tpu.memory_space<vmem>>, %arg2: memref<8x4xf32, #tpu.memory_space<vmem>>, %arg3: memref<8x9xf32, #tpu.memory_space<vmem>>, %arg4: memref<4x8xf32, #tpu.memory_space<vmem>>, %arg5: memref<9x256xf32, #tpu.memory_space<vmem>>, %arg6: memref<2x4x256xf32, #tpu.memory_space<vmem>>) attributes {dimension_semantics = [#tpu.dimension_semantics<parallel>], iteration_bounds = array<i64: 1>, scalar_prefetch = 0 : i64, scratch_operands = 0 : i64, tpu.core_type = #tpu.core_type<tc>, window_params = [{transform_indices = @transform_0, window_bounds = array<i64: 2, 4, 256>}, {pipeline_mode = #tpu.pipeline_mode<synchronous>, transform_indices = @transform_1, window_bounds = array<i64: 8, 4>}, {pipeline_mode = #tpu.pipeline_mode<synchronous>, transform_indices = @transform_2, window_bounds = array<i64: 8, 9>}, {pipeline_mode = #tpu.pipeline_mode<synchronous>, transform_indices = @transform_3, window_bounds = array<i64: 4, 8>}, {pipeline_mode = #tpu.pipeline_mode<synchronous>, transform_indices = @transform_4, window_bounds = array<i64: 9, 256>}, {transform_indices = @transform_5, window_bounds = array<i64: 2, 4, 256>}]} {
    %c0 = arith.constant 0 : index
    %c0_0 = arith.constant 0 : index
    %c0_1 = arith.constant 0 : index
    %0 = vector.load %arg1[%c0, %c0_0, %c0_1] : memref<2x4x256xf32, #tpu.memory_space<vmem>>, vector<2x4x256xf32>
    %c0_2 = arith.constant 0 : index
    %c0_3 = arith.constant 0 : index
    %1 = vector.load %arg2[%c0_2, %c0_3] : memref<8x4xf32, #tpu.memory_space<vmem>>, vector<8x4xf32>
    %2 = vector.extract_strided_slice %1 {offsets = [0, 0], sizes = [8, 1], strides = [1, 1]} : vector<8x4xf32> to vector<8x1xf32>
    %3 = vector.shape_cast %2 : vector<8x1xf32> to vector<1x8x1xf32>
    %4 = vector.extract_strided_slice %0 {offsets = [0, 0, 0], sizes = [2, 1, 256], strides = [1, 1, 1]} : vector<2x4x256xf32> to vector<2x1x256xf32>
    %5 = vector.broadcast %3 : vector<1x8x1xf32> to vector<2x8x256xf32>
    %6 = vector.broadcast %4 : vector<2x1x256xf32> to vector<2x8x256xf32>
    %7 = arith.mulf %5, %6 : vector<2x8x256xf32>
    %8 = vector.extract_strided_slice %1 {offsets = [0, 1], sizes = [8, 1], strides = [1, 1]} : vector<8x4xf32> to vector<8x1xf32>
    %9 = vector.shape_cast %8 : vector<8x1xf32> to vector<1x8x1xf32>
    %10 = vector.extract_strided_slice %0 {offsets = [0, 1, 0], sizes = [2, 1, 256], strides = [1, 1, 1]} : vector<2x4x256xf32> to vector<2x1x256xf32>
    %11 = vector.broadcast %9 : vector<1x8x1xf32> to vector<2x8x256xf32>
    %12 = vector.broadcast %10 : vector<2x1x256xf32> to vector<2x8x256xf32>
    %13 = arith.mulf %11, %12 : vector<2x8x256xf32>
    %14 = arith.addf %7, %13 : vector<2x8x256xf32>
    %15 = vector.extract_strided_slice %1 {offsets = [0, 2], sizes = [8, 1], strides = [1, 1]} : vector<8x4xf32> to vector<8x1xf32>
    %16 = vector.shape_cast %15 : vector<8x1xf32> to vector<1x8x1xf32>
    %17 = vector.extract_strided_slice %0 {offsets = [0, 2, 0], sizes = [2, 1, 256], strides = [1, 1, 1]} : vector<2x4x256xf32> to vector<2x1x256xf32>
    %18 = vector.broadcast %16 : vector<1x8x1xf32> to vector<2x8x256xf32>
    %19 = vector.broadcast %17 : vector<2x1x256xf32> to vector<2x8x256xf32>
    %20 = arith.mulf %18, %19 : vector<2x8x256xf32>
    %21 = arith.addf %14, %20 : vector<2x8x256xf32>
    %22 = vector.extract_strided_slice %1 {offsets = [0, 3], sizes = [8, 1], strides = [1, 1]} : vector<8x4xf32> to vector<8x1xf32>
    %23 = vector.shape_cast %22 : vector<8x1xf32> to vector<1x8x1xf32>
    %24 = vector.extract_strided_slice %0 {offsets = [0, 3, 0], sizes = [2, 1, 256], strides = [1, 1, 1]} : vector<2x4x256xf32> to vector<2x1x256xf32>
    %25 = vector.broadcast %23 : vector<1x8x1xf32> to vector<2x8x256xf32>
    %26 = vector.broadcast %24 : vector<2x1x256xf32> to vector<2x8x256xf32>
    %27 = arith.mulf %25, %26 : vector<2x8x256xf32>
    %28 = arith.addf %21, %27 : vector<2x8x256xf32>
    %cst = arith.constant dense<0.000000e+00> : vector<2x8xf32>
    %29 = vector.multi_reduction <add>, %28, %cst [2] : vector<2x8x256xf32> to vector<2x8xf32>
    %30 = vector.shape_cast %29 : vector<2x8xf32> to vector<2x8x1xf32>
    %cst_4 = arith.constant 2.560000e+02 : f32
    %31 = vector.broadcast %cst_4 : f32 to vector<2x8x1xf32>
    %32 = arith.divf %30, %31 : vector<2x8x1xf32>
    %33 = arith.mulf %28, %28 : vector<2x8x256xf32>
    %cst_5 = arith.constant dense<0.000000e+00> : vector<2x8xf32>
    %34 = vector.multi_reduction <add>, %33, %cst_5 [2] : vector<2x8x256xf32> to vector<2x8xf32>
    %35 = vector.shape_cast %34 : vector<2x8xf32> to vector<2x8x1xf32>
    %cst_6 = arith.constant 2.560000e+02 : f32
    %36 = vector.broadcast %cst_6 : f32 to vector<2x8x1xf32>
    %37 = arith.divf %35, %36 : vector<2x8x1xf32>
    %38 = arith.mulf %32, %32 : vector<2x8x1xf32>
    %39 = arith.subf %37, %38 : vector<2x8x1xf32>
    %cst_7 = arith.constant 0.000000e+00 : f32
    %40 = vector.broadcast %cst_7 : f32 to vector<2x8x1xf32>
    %41 = arith.maximumf %39, %40 : vector<2x8x1xf32>
    %42 = vector.broadcast %32 : vector<2x8x1xf32> to vector<2x8x256xf32>
    %43 = arith.subf %28, %42 : vector<2x8x256xf32>
    %cst_8 = arith.constant 9.99999974E-6 : f32
    %44 = vector.broadcast %cst_8 : f32 to vector<2x8x1xf32>
    %45 = arith.addf %41, %44 : vector<2x8x1xf32>
    %46 = math.rsqrt %45 : vector<2x8x1xf32>
    %47 = vector.broadcast %46 : vector<2x8x1xf32> to vector<2x8x256xf32>
    %48 = arith.mulf %43, %47 : vector<2x8x256xf32>
    %cst_9 = arith.constant 0.000000e+00 : f32
    %49 = vector.broadcast %cst_9 : f32 to vector<2x8x256xf32>
    %50 = arith.cmpf ogt, %48, %49 : vector<2x8x256xf32>
    %cst_10 = arith.constant 2.000000e-01 : f32
    %51 = vector.broadcast %cst_10 : f32 to vector<2x8x256xf32>
    %52 = arith.mulf %51, %48 : vector<2x8x256xf32>
    %53 = arith.select %50, %48, %52 : vector<2x8x256xi1>, vector<2x8x256xf32>
    %c0_11 = arith.constant 0 : index
    %c0_12 = arith.constant 0 : index
    %54 = vector.load %arg3[%c0_11, %c0_12] : memref<8x9xf32, #tpu.memory_space<vmem>>, vector<8x9xf32>
    %c0_13 = arith.constant 0 : index
    %c0_14 = arith.constant 0 : index
    %55 = vector.load %arg5[%c0_13, %c0_14] : memref<9x256xf32, #tpu.memory_space<vmem>>, vector<9x256xf32>
    %cst_15 = arith.constant 0.000000e+00 : f32
    %56 = vector.broadcast %cst_15 : f32 to vector<2x8x256xf32>
    %c17_i32 = arith.constant 17 : i32
    %57 = tpu.dynamic_rotate %53 by %c17_i32 dim 2 : vector<2x8x256xf32>, i32 -> vector<2x8x256xf32>
    %58 = vector.extract_strided_slice %54 {offsets = [0, 0], sizes = [8, 1], strides = [1, 1]} : vector<8x9xf32> to vector<8x1xf32>
    %59 = vector.shape_cast %58 : vector<8x1xf32> to vector<8xf32>
    %60 = vector.shape_cast %59 : vector<8xf32> to vector<1x8x1xf32>
    %61 = vector.extract_strided_slice %55 {offsets = [0, 0], sizes = [1, 256], strides = [1, 1]} : vector<9x256xf32> to vector<1x256xf32>
    %62 = vector.shape_cast %61 : vector<1x256xf32> to vector<256xf32>
    %63 = vector.shape_cast %62 : vector<256xf32> to vector<1x1x256xf32>
    %64 = vector.broadcast %63 : vector<1x1x256xf32> to vector<2x8x256xf32>
    %65 = arith.mulf %57, %64 : vector<2x8x256xf32>
    %66 = vector.broadcast %60 : vector<1x8x1xf32> to vector<2x8x256xf32>
    %67 = arith.mulf %65, %66 : vector<2x8x256xf32>
    %68 = arith.addf %56, %67 : vector<2x8x256xf32>
    %c16_i32 = arith.constant 16 : i32
    %69 = tpu.dynamic_rotate %53 by %c16_i32 dim 2 : vector<2x8x256xf32>, i32 -> vector<2x8x256xf32>
    %70 = vector.extract_strided_slice %54 {offsets = [0, 1], sizes = [8, 1], strides = [1, 1]} : vector<8x9xf32> to vector<8x1xf32>
    %71 = vector.shape_cast %70 : vector<8x1xf32> to vector<8xf32>
    %72 = vector.shape_cast %71 : vector<8xf32> to vector<1x8x1xf32>
    %73 = vector.extract_strided_slice %55 {offsets = [1, 0], sizes = [1, 256], strides = [1, 1]} : vector<9x256xf32> to vector<1x256xf32>
    %74 = vector.shape_cast %73 : vector<1x256xf32> to vector<256xf32>
    %75 = vector.shape_cast %74 : vector<256xf32> to vector<1x1x256xf32>
    %76 = vector.broadcast %75 : vector<1x1x256xf32> to vector<2x8x256xf32>
    %77 = arith.mulf %69, %76 : vector<2x8x256xf32>
    %78 = vector.broadcast %72 : vector<1x8x1xf32> to vector<2x8x256xf32>
    %79 = arith.mulf %77, %78 : vector<2x8x256xf32>
    %80 = arith.addf %68, %79 : vector<2x8x256xf32>
    %c15_i32 = arith.constant 15 : i32
    %81 = tpu.dynamic_rotate %53 by %c15_i32 dim 2 : vector<2x8x256xf32>, i32 -> vector<2x8x256xf32>
    %82 = vector.extract_strided_slice %54 {offsets = [0, 2], sizes = [8, 1], strides = [1, 1]} : vector<8x9xf32> to vector<8x1xf32>
    %83 = vector.shape_cast %82 : vector<8x1xf32> to vector<8xf32>
    %84 = vector.shape_cast %83 : vector<8xf32> to vector<1x8x1xf32>
    %85 = vector.extract_strided_slice %55 {offsets = [2, 0], sizes = [1, 256], strides = [1, 1]} : vector<9x256xf32> to vector<1x256xf32>
    %86 = vector.shape_cast %85 : vector<1x256xf32> to vector<256xf32>
    %87 = vector.shape_cast %86 : vector<256xf32> to vector<1x1x256xf32>
    %88 = vector.broadcast %87 : vector<1x1x256xf32> to vector<2x8x256xf32>
    %89 = arith.mulf %81, %88 : vector<2x8x256xf32>
    %90 = vector.broadcast %84 : vector<1x8x1xf32> to vector<2x8x256xf32>
    %91 = arith.mulf %89, %90 : vector<2x8x256xf32>
    %92 = arith.addf %80, %91 : vector<2x8x256xf32>
    %c1_i32 = arith.constant 1 : i32
    %93 = tpu.dynamic_rotate %53 by %c1_i32 dim 2 : vector<2x8x256xf32>, i32 -> vector<2x8x256xf32>
    %94 = vector.extract_strided_slice %54 {offsets = [0, 3], sizes = [8, 1], strides = [1, 1]} : vector<8x9xf32> to vector<8x1xf32>
    %95 = vector.shape_cast %94 : vector<8x1xf32> to vector<8xf32>
    %96 = vector.shape_cast %95 : vector<8xf32> to vector<1x8x1xf32>
    %97 = vector.extract_strided_slice %55 {offsets = [3, 0], sizes = [1, 256], strides = [1, 1]} : vector<9x256xf32> to vector<1x256xf32>
    %98 = vector.shape_cast %97 : vector<1x256xf32> to vector<256xf32>
    %99 = vector.shape_cast %98 : vector<256xf32> to vector<1x1x256xf32>
    %100 = vector.broadcast %99 : vector<1x1x256xf32> to vector<2x8x256xf32>
    %101 = arith.mulf %93, %100 : vector<2x8x256xf32>
    %102 = vector.broadcast %96 : vector<1x8x1xf32> to vector<2x8x256xf32>
    %103 = arith.mulf %101, %102 : vector<2x8x256xf32>
    %104 = arith.addf %92, %103 : vector<2x8x256xf32>
    %105 = vector.extract_strided_slice %54 {offsets = [0, 4], sizes = [8, 1], strides = [1, 1]} : vector<8x9xf32> to vector<8x1xf32>
    %106 = vector.shape_cast %105 : vector<8x1xf32> to vector<8xf32>
    %107 = vector.shape_cast %106 : vector<8xf32> to vector<1x8x1xf32>
    %108 = vector.broadcast %107 : vector<1x8x1xf32> to vector<2x8x256xf32>
    %109 = arith.mulf %53, %108 : vector<2x8x256xf32>
    %110 = arith.addf %104, %109 : vector<2x8x256xf32>
    %c255_i32 = arith.constant 255 : i32
    %111 = tpu.dynamic_rotate %53 by %c255_i32 dim 2 : vector<2x8x256xf32>, i32 -> vector<2x8x256xf32>
    %112 = vector.extract_strided_slice %54 {offsets = [0, 5], sizes = [8, 1], strides = [1, 1]} : vector<8x9xf32> to vector<8x1xf32>
    %113 = vector.shape_cast %112 : vector<8x1xf32> to vector<8xf32>
    %114 = vector.shape_cast %113 : vector<8xf32> to vector<1x8x1xf32>
    %115 = vector.extract_strided_slice %55 {offsets = [5, 0], sizes = [1, 256], strides = [1, 1]} : vector<9x256xf32> to vector<1x256xf32>
    %116 = vector.shape_cast %115 : vector<1x256xf32> to vector<256xf32>
    %117 = vector.shape_cast %116 : vector<256xf32> to vector<1x1x256xf32>
    %118 = vector.broadcast %117 : vector<1x1x256xf32> to vector<2x8x256xf32>
    %119 = arith.mulf %111, %118 : vector<2x8x256xf32>
    %120 = vector.broadcast %114 : vector<1x8x1xf32> to vector<2x8x256xf32>
    %121 = arith.mulf %119, %120 : vector<2x8x256xf32>
    %122 = arith.addf %110, %121 : vector<2x8x256xf32>
    %c241_i32 = arith.constant 241 : i32
    %123 = tpu.dynamic_rotate %53 by %c241_i32 dim 2 : vector<2x8x256xf32>, i32 -> vector<2x8x256xf32>
    %124 = vector.extract_strided_slice %54 {offsets = [0, 6], sizes = [8, 1], strides = [1, 1]} : vector<8x9xf32> to vector<8x1xf32>
    %125 = vector.shape_cast %124 : vector<8x1xf32> to vector<8xf32>
    %126 = vector.shape_cast %125 : vector<8xf32> to vector<1x8x1xf32>
    %127 = vector.extract_strided_slice %55 {offsets = [6, 0], sizes = [1, 256], strides = [1, 1]} : vector<9x256xf32> to vector<1x256xf32>
    %128 = vector.shape_cast %127 : vector<1x256xf32> to vector<256xf32>
    %129 = vector.shape_cast %128 : vector<256xf32> to vector<1x1x256xf32>
    %130 = vector.broadcast %129 : vector<1x1x256xf32> to vector<2x8x256xf32>
    %131 = arith.mulf %123, %130 : vector<2x8x256xf32>
    %132 = vector.broadcast %126 : vector<1x8x1xf32> to vector<2x8x256xf32>
    %133 = arith.mulf %131, %132 : vector<2x8x256xf32>
    %134 = arith.addf %122, %133 : vector<2x8x256xf32>
    %c240_i32 = arith.constant 240 : i32
    %135 = tpu.dynamic_rotate %53 by %c240_i32 dim 2 : vector<2x8x256xf32>, i32 -> vector<2x8x256xf32>
    %136 = vector.extract_strided_slice %54 {offsets = [0, 7], sizes = [8, 1], strides = [1, 1]} : vector<8x9xf32> to vector<8x1xf32>
    %137 = vector.shape_cast %136 : vector<8x1xf32> to vector<8xf32>
    %138 = vector.shape_cast %137 : vector<8xf32> to vector<1x8x1xf32>
    %139 = vector.extract_strided_slice %55 {offsets = [7, 0], sizes = [1, 256], strides = [1, 1]} : vector<9x256xf32> to vector<1x256xf32>
    %140 = vector.shape_cast %139 : vector<1x256xf32> to vector<256xf32>
    %141 = vector.shape_cast %140 : vector<256xf32> to vector<1x1x256xf32>
    %142 = vector.broadcast %141 : vector<1x1x256xf32> to vector<2x8x256xf32>
    %143 = arith.mulf %135, %142 : vector<2x8x256xf32>
    %144 = vector.broadcast %138 : vector<1x8x1xf32> to vector<2x8x256xf32>
    %145 = arith.mulf %143, %144 : vector<2x8x256xf32>
    %146 = arith.addf %134, %145 : vector<2x8x256xf32>
    %c239_i32 = arith.constant 239 : i32
    %147 = tpu.dynamic_rotate %53 by %c239_i32 dim 2 : vector<2x8x256xf32>, i32 -> vector<2x8x256xf32>
    %148 = vector.extract_strided_slice %54 {offsets = [0, 8], sizes = [8, 1], strides = [1, 1]} : vector<8x9xf32> to vector<8x1xf32>
    %149 = vector.shape_cast %148 : vector<8x1xf32> to vector<8xf32>
    %150 = vector.shape_cast %149 : vector<8xf32> to vector<1x8x1xf32>
    %151 = vector.extract_strided_slice %55 {offsets = [8, 0], sizes = [1, 256], strides = [1, 1]} : vector<9x256xf32> to vector<1x256xf32>
    %152 = vector.shape_cast %151 : vector<1x256xf32> to vector<256xf32>
    %153 = vector.shape_cast %152 : vector<256xf32> to vector<1x1x256xf32>
    %154 = vector.broadcast %153 : vector<1x1x256xf32> to vector<2x8x256xf32>
    %155 = arith.mulf %147, %154 : vector<2x8x256xf32>
    %156 = vector.broadcast %150 : vector<1x8x1xf32> to vector<2x8x256xf32>
    %157 = arith.mulf %155, %156 : vector<2x8x256xf32>
    %158 = arith.addf %146, %157 : vector<2x8x256xf32>
    %cst_16 = arith.constant dense<0.000000e+00> : vector<2x8xf32>
    %159 = vector.multi_reduction <add>, %158, %cst_16 [2] : vector<2x8x256xf32> to vector<2x8xf32>
    %160 = vector.shape_cast %159 : vector<2x8xf32> to vector<2x8x1xf32>
    %cst_17 = arith.constant 2.560000e+02 : f32
    %161 = vector.broadcast %cst_17 : f32 to vector<2x8x1xf32>
    %162 = arith.divf %160, %161 : vector<2x8x1xf32>
    %163 = arith.mulf %158, %158 : vector<2x8x256xf32>
    %cst_18 = arith.constant dense<0.000000e+00> : vector<2x8xf32>
    %164 = vector.multi_reduction <add>, %163, %cst_18 [2] : vector<2x8x256xf32> to vector<2x8xf32>
    %165 = vector.shape_cast %164 : vector<2x8xf32> to vector<2x8x1xf32>
    %cst_19 = arith.constant 2.560000e+02 : f32
    %166 = vector.broadcast %cst_19 : f32 to vector<2x8x1xf32>
    %167 = arith.divf %165, %166 : vector<2x8x1xf32>
    %168 = arith.mulf %162, %162 : vector<2x8x1xf32>
    %169 = arith.subf %167, %168 : vector<2x8x1xf32>
    %cst_20 = arith.constant 0.000000e+00 : f32
    %170 = vector.broadcast %cst_20 : f32 to vector<2x8x1xf32>
    %171 = arith.maximumf %169, %170 : vector<2x8x1xf32>
    %172 = vector.broadcast %162 : vector<2x8x1xf32> to vector<2x8x256xf32>
    %173 = arith.subf %158, %172 : vector<2x8x256xf32>
    %cst_21 = arith.constant 9.99999974E-6 : f32
    %174 = vector.broadcast %cst_21 : f32 to vector<2x8x1xf32>
    %175 = arith.addf %171, %174 : vector<2x8x1xf32>
    %176 = math.rsqrt %175 : vector<2x8x1xf32>
    %177 = vector.broadcast %176 : vector<2x8x1xf32> to vector<2x8x256xf32>
    %178 = arith.mulf %173, %177 : vector<2x8x256xf32>
    %cst_22 = arith.constant 0.000000e+00 : f32
    %179 = vector.broadcast %cst_22 : f32 to vector<2x8x256xf32>
    %180 = arith.cmpf ogt, %178, %179 : vector<2x8x256xf32>
    %cst_23 = arith.constant 2.000000e-01 : f32
    %181 = vector.broadcast %cst_23 : f32 to vector<2x8x256xf32>
    %182 = arith.mulf %181, %178 : vector<2x8x256xf32>
    %183 = arith.select %180, %178, %182 : vector<2x8x256xi1>, vector<2x8x256xf32>
    %c0_24 = arith.constant 0 : index
    %c0_25 = arith.constant 0 : index
    %184 = vector.load %arg4[%c0_24, %c0_25] : memref<4x8xf32, #tpu.memory_space<vmem>>, vector<4x8xf32>
    %185 = vector.extract_strided_slice %184 {offsets = [0, 0], sizes = [4, 1], strides = [1, 1]} : vector<4x8xf32> to vector<4x1xf32>
    %186 = vector.shape_cast %185 : vector<4x1xf32> to vector<1x4x1xf32>
    %187 = vector.extract_strided_slice %183 {offsets = [0, 0, 0], sizes = [2, 1, 256], strides = [1, 1, 1]} : vector<2x8x256xf32> to vector<2x1x256xf32>
    %188 = vector.broadcast %186 : vector<1x4x1xf32> to vector<2x4x256xf32>
    %189 = vector.broadcast %187 : vector<2x1x256xf32> to vector<2x4x256xf32>
    %190 = arith.mulf %188, %189 : vector<2x4x256xf32>
    %191 = vector.extract_strided_slice %184 {offsets = [0, 1], sizes = [4, 1], strides = [1, 1]} : vector<4x8xf32> to vector<4x1xf32>
    %192 = vector.shape_cast %191 : vector<4x1xf32> to vector<1x4x1xf32>
    %193 = vector.extract_strided_slice %183 {offsets = [0, 1, 0], sizes = [2, 1, 256], strides = [1, 1, 1]} : vector<2x8x256xf32> to vector<2x1x256xf32>
    %194 = vector.broadcast %192 : vector<1x4x1xf32> to vector<2x4x256xf32>
    %195 = vector.broadcast %193 : vector<2x1x256xf32> to vector<2x4x256xf32>
    %196 = arith.mulf %194, %195 : vector<2x4x256xf32>
    %197 = arith.addf %190, %196 : vector<2x4x256xf32>
    %198 = vector.extract_strided_slice %184 {offsets = [0, 2], sizes = [4, 1], strides = [1, 1]} : vector<4x8xf32> to vector<4x1xf32>
    %199 = vector.shape_cast %198 : vector<4x1xf32> to vector<1x4x1xf32>
    %200 = vector.extract_strided_slice %183 {offsets = [0, 2, 0], sizes = [2, 1, 256], strides = [1, 1, 1]} : vector<2x8x256xf32> to vector<2x1x256xf32>
    %201 = vector.broadcast %199 : vector<1x4x1xf32> to vector<2x4x256xf32>
    %202 = vector.broadcast %200 : vector<2x1x256xf32> to vector<2x4x256xf32>
    %203 = arith.mulf %201, %202 : vector<2x4x256xf32>
    %204 = arith.addf %197, %203 : vector<2x4x256xf32>
    %205 = vector.extract_strided_slice %184 {offsets = [0, 3], sizes = [4, 1], strides = [1, 1]} : vector<4x8xf32> to vector<4x1xf32>
    %206 = vector.shape_cast %205 : vector<4x1xf32> to vector<1x4x1xf32>
    %207 = vector.extract_strided_slice %183 {offsets = [0, 3, 0], sizes = [2, 1, 256], strides = [1, 1, 1]} : vector<2x8x256xf32> to vector<2x1x256xf32>
    %208 = vector.broadcast %206 : vector<1x4x1xf32> to vector<2x4x256xf32>
    %209 = vector.broadcast %207 : vector<2x1x256xf32> to vector<2x4x256xf32>
    %210 = arith.mulf %208, %209 : vector<2x4x256xf32>
    %211 = arith.addf %204, %210 : vector<2x4x256xf32>
    %212 = vector.extract_strided_slice %184 {offsets = [0, 4], sizes = [4, 1], strides = [1, 1]} : vector<4x8xf32> to vector<4x1xf32>
    %213 = vector.shape_cast %212 : vector<4x1xf32> to vector<1x4x1xf32>
    %214 = vector.extract_strided_slice %183 {offsets = [0, 4, 0], sizes = [2, 1, 256], strides = [1, 1, 1]} : vector<2x8x256xf32> to vector<2x1x256xf32>
    %215 = vector.broadcast %213 : vector<1x4x1xf32> to vector<2x4x256xf32>
    %216 = vector.broadcast %214 : vector<2x1x256xf32> to vector<2x4x256xf32>
    %217 = arith.mulf %215, %216 : vector<2x4x256xf32>
    %218 = arith.addf %211, %217 : vector<2x4x256xf32>
    %219 = vector.extract_strided_slice %184 {offsets = [0, 5], sizes = [4, 1], strides = [1, 1]} : vector<4x8xf32> to vector<4x1xf32>
    %220 = vector.shape_cast %219 : vector<4x1xf32> to vector<1x4x1xf32>
    %221 = vector.extract_strided_slice %183 {offsets = [0, 5, 0], sizes = [2, 1, 256], strides = [1, 1, 1]} : vector<2x8x256xf32> to vector<2x1x256xf32>
    %222 = vector.broadcast %220 : vector<1x4x1xf32> to vector<2x4x256xf32>
    %223 = vector.broadcast %221 : vector<2x1x256xf32> to vector<2x4x256xf32>
    %224 = arith.mulf %222, %223 : vector<2x4x256xf32>
    %225 = arith.addf %218, %224 : vector<2x4x256xf32>
    %226 = vector.extract_strided_slice %184 {offsets = [0, 6], sizes = [4, 1], strides = [1, 1]} : vector<4x8xf32> to vector<4x1xf32>
    %227 = vector.shape_cast %226 : vector<4x1xf32> to vector<1x4x1xf32>
    %228 = vector.extract_strided_slice %183 {offsets = [0, 6, 0], sizes = [2, 1, 256], strides = [1, 1, 1]} : vector<2x8x256xf32> to vector<2x1x256xf32>
    %229 = vector.broadcast %227 : vector<1x4x1xf32> to vector<2x4x256xf32>
    %230 = vector.broadcast %228 : vector<2x1x256xf32> to vector<2x4x256xf32>
    %231 = arith.mulf %229, %230 : vector<2x4x256xf32>
    %232 = arith.addf %225, %231 : vector<2x4x256xf32>
    %233 = vector.extract_strided_slice %184 {offsets = [0, 7], sizes = [4, 1], strides = [1, 1]} : vector<4x8xf32> to vector<4x1xf32>
    %234 = vector.shape_cast %233 : vector<4x1xf32> to vector<1x4x1xf32>
    %235 = vector.extract_strided_slice %183 {offsets = [0, 7, 0], sizes = [2, 1, 256], strides = [1, 1, 1]} : vector<2x8x256xf32> to vector<2x1x256xf32>
    %236 = vector.broadcast %234 : vector<1x4x1xf32> to vector<2x4x256xf32>
    %237 = vector.broadcast %235 : vector<2x1x256xf32> to vector<2x4x256xf32>
    %238 = arith.mulf %236, %237 : vector<2x4x256xf32>
    %239 = arith.addf %232, %238 : vector<2x4x256xf32>
    %cst_26 = arith.constant dense<0.000000e+00> : vector<2x4xf32>
    %240 = vector.multi_reduction <add>, %239, %cst_26 [2] : vector<2x4x256xf32> to vector<2x4xf32>
    %241 = vector.shape_cast %240 : vector<2x4xf32> to vector<2x4x1xf32>
    %cst_27 = arith.constant 2.560000e+02 : f32
    %242 = vector.broadcast %cst_27 : f32 to vector<2x4x1xf32>
    %243 = arith.divf %241, %242 : vector<2x4x1xf32>
    %244 = arith.mulf %239, %239 : vector<2x4x256xf32>
    %cst_28 = arith.constant dense<0.000000e+00> : vector<2x4xf32>
    %245 = vector.multi_reduction <add>, %244, %cst_28 [2] : vector<2x4x256xf32> to vector<2x4xf32>
    %246 = vector.shape_cast %245 : vector<2x4xf32> to vector<2x4x1xf32>
    %cst_29 = arith.constant 2.560000e+02 : f32
    %247 = vector.broadcast %cst_29 : f32 to vector<2x4x1xf32>
    %248 = arith.divf %246, %247 : vector<2x4x1xf32>
    %249 = arith.mulf %243, %243 : vector<2x4x1xf32>
    %250 = arith.subf %248, %249 : vector<2x4x1xf32>
    %cst_30 = arith.constant 0.000000e+00 : f32
    %251 = vector.broadcast %cst_30 : f32 to vector<2x4x1xf32>
    %252 = arith.maximumf %250, %251 : vector<2x4x1xf32>
    %253 = vector.broadcast %243 : vector<2x4x1xf32> to vector<2x4x256xf32>
    %254 = arith.subf %239, %253 : vector<2x4x256xf32>
    %cst_31 = arith.constant 9.99999974E-6 : f32
    %255 = vector.broadcast %cst_31 : f32 to vector<2x4x1xf32>
    %256 = arith.addf %252, %255 : vector<2x4x1xf32>
    %257 = math.rsqrt %256 : vector<2x4x1xf32>
    %258 = vector.broadcast %257 : vector<2x4x1xf32> to vector<2x4x256xf32>
    %259 = arith.mulf %254, %258 : vector<2x4x256xf32>
    %260 = arith.addf %259, %0 : vector<2x4x256xf32>
    %c0_32 = arith.constant 0 : index
    %c0_33 = arith.constant 0 : index
    %c0_34 = arith.constant 0 : index
    %261 = vector.load %arg6[%c0_32, %c0_33, %c0_34] : memref<2x4x256xf32, #tpu.memory_space<vmem>>, vector<2x4x256xf32>
    tpu.vector_store %arg6[%c0_32, %c0_33, %c0_34], %260 {strides = array<i32>} : memref<2x4x256xf32, #tpu.memory_space<vmem>>, vector<2x4x256xf32>,
    return
  }
  func.func @transform_0(%arg0: i32) -> (i32, i32, i32) {
    %c0_i32 = arith.constant 0 : i32
    %c0_i32_0 = arith.constant 0 : i32
    %c0_i32_1 = arith.constant 0 : i32
    return %arg0, %c0_i32, %c0_i32_0 : i32, i32, i32
  }
  func.func @transform_1(%arg0: i32) -> (i32, i32) {
    %c0_i32 = arith.constant 0 : i32
    %c0_i32_0 = arith.constant 0 : i32
    %c0_i32_1 = arith.constant 0 : i32
    return %c0_i32, %c0_i32_0 : i32, i32
  }
  func.func @transform_2(%arg0: i32) -> (i32, i32) {
    %c0_i32 = arith.constant 0 : i32
    %c0_i32_0 = arith.constant 0 : i32
    %c0_i32_1 = arith.constant 0 : i32
    return %c0_i32, %c0_i32_0 : i32, i32
  }
  func.func @transform_3(%arg0: i32) -> (i32, i32) {
    %c0_i32 = arith.constant 0 : i32
    %c0_i32_0 = arith.constant 0 : i32
    %c0_i32_1 = arith.constant 0 : i32
    return %c0_i32, %c0_i32_0 : i32, i32
  }
  func.func @transform_4(%arg0: i32) -> (i32, i32) {
    %c0_i32 = arith.constant 0 : i32
    %c0_i32_0 = arith.constant 0 : i32
    %c0_i32_1 = arith.constant 0 : i32
    return %c0_i32, %c0_i32_0 : i32, i32
  }
  func.func @transform_5(%arg0: i32) -> (i32, i32, i32) {
    %c0_i32 = arith.constant 0 : i32
    %c0_i32_0 = arith.constant 0 : i32
    %c0_i32_1 = arith.constant 0 : i32
    return %arg0, %c0_i32, %c0_i32_0 : i32, i32, i32
  }
}

</mosaic_0001>

<llo_original>
// kernel: tpu_custom_call.1
$region0: #{tpu_custom_call.1}
  #allocation0 [shape = 'u32[]', space=smem, size = 0x4, offset = 0x4, fixed_abs, tag = 'smem constant byte address 0x4 - core index']
  #allocation1 [shape = 'u32[144,128]{1,0:T(1,128)}', space=vmem, size = 0x12000, scoped, tag = 'internal scratch']
  %s0 = inlined_call_operand.hbm [shape: f32[2,4,256], index: 0, kind: input, shape index: {}]
  %s1 = inlined_call_operand.vmem [shape: f32[8,4], index: 1, kind: input, shape index: {}]
  %s2 = inlined_call_operand.vmem [shape: f32[8,9], index: 2, kind: input, shape index: {}]
  %s3 = inlined_call_operand.vmem [shape: f32[4,8], index: 3, kind: input, shape index: {}]
  %s4 = inlined_call_operand.hbm [shape: f32[9,256], index: 4, kind: input, shape index: {}]
  %s5 = inlined_call_operand.hbm [shape: f32[2,4,256], index: 5, kind: output, shape index: {}]
  %s6 = sld [smem:[#allocation0]]
  $region38: #{tpu_custom_call.1} parent=0
    _
  %s8 = ssub.s32 1, %s6
  %s9 = scalar_select 0, %s8, %s6
  $region1: #{tpu_custom_call.1} parent=0
    #allocation2 [shape = 'u8[8192]{0}', space=vmem, size = 0x2000, scoped, tag = 'input window, operand 0, single buffered']
    #allocation3 [shape = 's32[1]{0}', space=sflag, size = 0x4, scoped, tag = 'scoped memory for tpu_custom_call.1']
    #allocation4 [shape = 's32[1]{0}', space=sflag, size = 0x4, scoped, tag = 'scoped memory for tpu_custom_call.1']
    #allocation5 [shape = 'u8[16384]{0}', space=vmem, size = 0x4000, scoped, tag = 'input window, operand 4, single buffered']
    #allocation6 [shape = 's32[1]{0}', space=sflag, size = 0x4, scoped, tag = 'scoped memory for tpu_custom_call.1']
    #allocation7 [shape = 'u8[8192]{0}', space=vmem, size = 0x2000, scoped, tag = 'output window, operand 0, single buffered']
    %10 = vsyncpa [#allocation3], 0
    %11 = vsyncpa [#allocation6], 0
    %12 = vsyncpa [#allocation4], 0
    // Predicated region
    $region2: #{tpu_custom_call.1} parent=1 // pred_check
      _
    $region3: #{tpu_custom_call.1} parent=1 // pred_check_branch
      %14 = sbr.rel (0) target = $region5
    $region4: #{tpu_custom_call.1} parent=1 // pred_region
      %s16 = ssub.s32 256, 256
      %17 = vsyncadd [#allocation3], %s16
      %s18 = sshll.u32 [#allocation2], 4
      %s19 = int_to_ptr.vmem [resolvable:$true] %s18
      %24 = dma.hbm_to_vmem [thread:$0]  %s0, 256, %s19, [#allocation3], 128, 128, 8
    $region5: #{tpu_custom_call.1} parent=1 // pred_fallthru
      _
    // Predicated region
    $region6: #{tpu_custom_call.1} parent=1 // pred_check
      _
    $region7: #{tpu_custom_call.1} parent=1 // pred_check_branch
      %26 = sbr.rel (0) target = $region9
    $region8: #{tpu_custom_call.1} parent=1 // pred_region
      _
    $region9: #{tpu_custom_call.1} parent=1 // pred_fallthru
      _
    // Predicated region
    $region10: #{tpu_custom_call.1} parent=1 // pred_check
      _
    $region11: #{tpu_custom_call.1} parent=1 // pred_check_branch
      %28 = sbr.rel (0) target = $region13
    $region12: #{tpu_custom_call.1} parent=1 // pred_region
      _
    $region13: #{tpu_custom_call.1} parent=1 // pred_fallthru
      _
    // Predicated region
    $region14: #{tpu_custom_call.1} parent=1 // pred_check
      _
    $region15: #{tpu_custom_call.1} parent=1 // pred_check_branch
      %30 = sbr.rel (0) target = $region17
    $region16: #{tpu_custom_call.1} parent=1 // pred_region
      _
    $region17: #{tpu_custom_call.1} parent=1 // pred_fallthru
      _
    // Predicated region
    $region18: #{tpu_custom_call.1} parent=1 // pred_check
      _
    $region19: #{tpu_custom_call.1} parent=1 // pred_check_branch
      %32 = sbr.rel (0) target = $region21
    $region20: #{tpu_custom_call.1} parent=1 // pred_region
      %s34 = ssub.s32 512, 512
      %35 = vsyncadd [#allocation6], %s34
      %s36 = sshll.u32 [#allocation5], 4
      %s37 = int_to_ptr.vmem [resolvable:$true] %s36
      %42 = dma.hbm_to_vmem [thread:$0]  %s4, 512, %s37, [#allocation6], 256, 256, 16
    $region21: #{tpu_custom_call.1} parent=1 // pred_fallthru
      _
    // Predicated region
    $region22: #{tpu_custom_call.1} parent=1 // pred_check
      _
    $region23: #{tpu_custom_call.1} parent=1 // pred_check_branch
      %44 = sbr.rel (0) target = $region25
    $region24: #{tpu_custom_call.1} parent=1 // pred_region
      %45 = dma.done [#allocation3], 256
    $region25: #{tpu_custom_call.1} parent=1 // pred_fallthru
      _
    // Predicated region
    $region26: #{tpu_custom_call.1} parent=1 // pred_check
      _
    $region27: #{tpu_custom_call.1} parent=1 // pred_check_branch
      %47 = sbr.rel (0) target = $region29
    $region28: #{tpu_custom_call.1} parent=1 // pred_region
      %48 = dma.done [#allocation6], 512
    $region29: #{tpu_custom_call.1} parent=1 // pred_fallthru
      _
    %v49 = vld [vmem:[#allocation2] sm:$0xff]
    %v50 = vld [vmem:[#allocation2 + $0x8] sm:$0xff]
    %v51 = vld [vmem:[%s1] sm:$0xff]
    %53 = vset.pattern.permute.xlu0 0
    %54 = vperm.xlu0 %53, %v51
    %v55 = vpop.permute.xlu0 %54
    %v59 = vlaneseq
    %v60 = vshrl.u32 %v59, 7
    %v61 = vsub.s32 0, %v60
    %v62 = vrot.slane %v49, %v61
    %v63 = vlaneseq
    %v64 = vshrl.u32 %v63, 7
    %v65 = vsub.s32 4, %v64
    %v66 = vrot.slane %v49, %v65
    %v67 = vlaneseq
    %v68 = vshrl.u32 %v67, 7
    %v69 = vsub.s32 0, %v68
    %v70 = vrot.slane %v50, %v69
    %v71 = vlaneseq
    %v72 = vshrl.u32 %v71, 7
    %v73 = vsub.s32 4, %v72
    %v74 = vrot.slane %v50, %v73
    %v79 = vlaneseq
    %v80 = vshrl.u32 %v79, 7
    %v81 = vsub.s32 0, %v80
    %v82 = vrot.slane %v62, %v81
    %v83 = vlaneseq
    %v84 = vshrl.u32 %v83, 7
    %v85 = vsub.s32 0, %v84
    %v86 = vrot.slane %v66, %v85
    %v87 = vlaneseq
    %v88 = vshrl.u32 %v87, 7
    %v89 = vsub.s32 0, %v88
    %v90 = vrot.slane %v70, %v89
    %v91 = vlaneseq
    %v92 = vshrl.u32 %v91, 7
    %v93 = vsub.s32 0, %v92
    %v94 = vrot.slane %v74, %v93
    %v95 = vmul.f32 %v55, %v82
    %v96 = vmul.f32 %v55, %v86
    %v97 = vmul.f32 %v55, %v90
    %v98 = vmul.f32 %v55, %v94
    %99 = vset.pattern.permute.xlu0 1
    %100 = vperm.xlu0 %99, %v51
    %v101 = vpop.permute.xlu0 %100
    %v103 = vlaneseq
    %v104 = vshrl.u32 %v103, 7
    %v105 = vsub.s32 1, %v104
    %v106 = vrot.slane %v49, %v105
    %v107 = vlaneseq
    %v108 = vshrl.u32 %v107, 7
    %v109 = vsub.s32 5, %v108
    %v110 = vrot.slane %v49, %v109
    %v111 = vlaneseq
    %v112 = vshrl.u32 %v111, 7
    %v113 = vsub.s32 1, %v112
    %v114 = vrot.slane %v50, %v113
    %v115 = vlaneseq
    %v116 = vshrl.u32 %v115, 7
    %v117 = vsub.s32 5, %v116
    %v118 = vrot.slane %v50, %v117
    %v123 = vlaneseq
    %v124 = vshrl.u32 %v123, 7
    %v125 = vsub.s32 1, %v124
    %v126 = vrot.slane %v106, %v125
    %v127 = vlaneseq
    %v128 = vshrl.u32 %v127, 7
    %v129 = vsub.s32 1, %v128
    %v130 = vrot.slane %v110, %v129
    %v131 = vlaneseq
    %v132 = vshrl.u32 %v131, 7
    %v133 = vsub.s32 1, %v132
    %v134 = vrot.slane %v114, %v133
    %v135 = vlaneseq
    %v136 = vshrl.u32 %v135, 7
    %v137 = vsub.s32 1, %v136
    %v138 = vrot.slane %v118, %v137
    %v139 = vmul.f32 %v101, %v126
    %v140 = vmul.f32 %v101, %v130
    %v141 = vmul.f32 %v101, %v134
    %v142 = vmul.f32 %v101, %v138
    %v143 = vadd.f32 %v95, %v139
    %v144 = vadd.f32 %v96, %v140
    %v145 = vadd.f32 %v97, %v141
    %v146 = vadd.f32 %v98, %v142
    %147 = vset.pattern.permute.xlu0 2
    %148 = vperm.xlu0 %147, %v51
    %v149 = vpop.permute.xlu0 %148
    %v151 = vlaneseq
    %v152 = vshrl.u32 %v151, 7
    %v153 = vsub.s32 2, %v152
    %v154 = vrot.slane %v49, %v153
    %v155 = vlaneseq
    %v156 = vshrl.u32 %v155, 7
    %v157 = vsub.s32 6, %v156
    %v158 = vrot.slane %v49, %v157
    %v159 = vlaneseq
    %v160 = vshrl.u32 %v159, 7
    %v161 = vsub.s32 2, %v160
    %v162 = vrot.slane %v50, %v161
    %v163 = vlaneseq
    %v164 = vshrl.u32 %v163, 7
    %v165 = vsub.s32 6, %v164
    %v166 = vrot.slane %v50, %v165
    %v171 = vlaneseq
    %v172 = vshrl.u32 %v171, 7
    %v173 = vsub.s32 2, %v172
    %v174 = vrot.slane %v154, %v173
    %v175 = vlaneseq
    %v176 = vshrl.u32 %v175, 7
    %v177 = vsub.s32 2, %v176
    %v178 = vrot.slane %v158, %v177
    %v179 = vlaneseq
    %v180 = vshrl.u32 %v179, 7
    %v181 = vsub.s32 2, %v180
    %v182 = vrot.slane %v162, %v181
    %v183 = vlaneseq
    %v184 = vshrl.u32 %v183, 7
    %v185 = vsub.s32 2, %v184
    %v186 = vrot.slane %v166, %v185
    %v187 = vmul.f32 %v149, %v174
    %v188 = vmul.f32 %v149, %v178
    %v189 = vmul.f32 %v149, %v182
    %v190 = vmul.f32 %v149, %v186
    %v191 = vadd.f32 %v143, %v187
    %v192 = vadd.f32 %v144, %v188
    %v193 = vadd.f32 %v145, %v189
    %v194 = vadd.f32 %v146, %v190
    %195 = vset.pattern.permute.xlu0 3
    %196 = vperm.xlu0 %195, %v51
    %v197 = vpop.permute.xlu0 %196
    %v199 = vlaneseq
    %v200 = vshrl.u32 %v199, 7
    %v201 = vsub.s32 3, %v200
    %v202 = vrot.slane %v49, %v201
    %v203 = vlaneseq
    %v204 = vshrl.u32 %v203, 7
    %v205 = vsub.s32 7, %v204
    %v206 = vrot.slane %v49, %v205
    %v207 = vlaneseq
    %v208 = vshrl.u32 %v207, 7
    %v209 = vsub.s32 3, %v208
    %v210 = vrot.slane %v50, %v209
    %v211 = vlaneseq
    %v212 = vshrl.u32 %v211, 7
    %v213 = vsub.s32 7, %v212
    %v214 = vrot.slane %v50, %v213
    %v219 = vlaneseq
    %v220 = vshrl.u32 %v219, 7
    %v221 = vsub.s32 3, %v220
    %v222 = vrot.slane %v202, %v221
    %v223 = vlaneseq
    %v224 = vshrl.u32 %v223, 7
    %v225 = vsub.s32 3, %v224
    %v226 = vrot.slane %v206, %v225
    %v227 = vlaneseq
    %v228 = vshrl.u32 %v227, 7
    %v229 = vsub.s32 3, %v228
    %v230 = vrot.slane %v210, %v229
    %v231 = vlaneseq
    %v232 = vshrl.u32 %v231, 7
    %v233 = vsub.s32 3, %v232
    %v234 = vrot.slane %v214, %v233
    %v235 = vmul.f32 %v197, %v222
    %v236 = vmul.f32 %v197, %v226
    %v237 = vmul.f32 %v197, %v230
    %v238 = vmul.f32 %v197, %v234
    %v239 = vadd.f32 %v191, %v235
    %v240 = vadd.f32 %v192, %v236
    %v241 = vadd.f32 %v193, %v237
    %v242 = vadd.f32 %v194, %v238
    %v243 = vadd.f32 %v239, %v240
    %244 = vadd.xlane.f32.xlu0 %v243
    %v245 = vpop.xlane.xlu0 %244
    %v246 = vadd.f32 %v241, %v242
    %247 = vadd.xlane.f32.xlu0 %v246
    %v248 = vpop.xlane.xlu0 %247
    %v249 = vrcp.pop 256.0
    %v250 = vmul.f32 %v245, %v249
    %v251 = vmul.f32 %v248, %v249
    %v252 = vmul.f32 %v239, %v239
    %v253 = vmul.f32 %v240, %v240
    %v254 = vmul.f32 %v241, %v241
    %v255 = vmul.f32 %v242, %v242
    %v256 = vadd.f32 %v252, %v253
    %257 = vadd.xlane.f32.xlu0 %v256
    %v258 = vpop.xlane.xlu0 %257
    %v259 = vadd.f32 %v254, %v255
    %260 = vadd.xlane.f32.xlu0 %v259
    %v261 = vpop.xlane.xlu0 %260
    %v262 = vmul.f32 %v258, %v249
    %v263 = vmul.f32 %v261, %v249
    %v264 = vmul.f32 %v250, %v250
    %v265 = vmul.f32 %v251, %v251
    %v266 = vsub.f32 %v262, %v264
    %v267 = vsub.f32 %v263, %v265
    %v268 = vmax.f32 %v266, 0.0
    %v269 = vmax.f32 %v267, 0.0
    %v270 = vsub.f32 %v239, %v250
    %v271 = vsub.f32 %v240, %v250
    %v272 = vsub.f32 %v241, %v251
    %v273 = vsub.f32 %v242, %v251
    %v274 = vadd.f32 %v268, 1e-05
    %v275 = vadd.f32 %v269, 1e-05
    %v276 = vrsqrt.pop %v274
    %v277 = vrsqrt.pop %v275
    %v278 = vmul.f32 %v270, %v276
    %v279 = vmul.f32 %v271, %v276
    %v280 = vmul.f32 %v272, %v277
    %v281 = vmul.f32 %v273, %v277
    %vm282 = vcmp.gt.f32.partialorder %v278, 0.0
    %vm283 = vcmp.gt.f32.partialorder %v279, 0.0
    %vm284 = vcmp.gt.f32.partialorder %v280, 0.0
    %vm285 = vcmp.gt.f32.partialorder %v281, 0.0
    %v286 = vmul.f32 %v278, 0.2
    %v287 = vmul.f32 %v279, 0.2
    %v288 = vmul.f32 %v280, 0.2
    %v289 = vmul.f32 %v281, 0.2
    %v290 = vsel %vm282, %v278, %v286
    %v291 = vsel %vm283, %v279, %v287
    %v292 = vsel %vm284, %v280, %v288
    %v293 = vsel %vm285, %v281, %v289
    %v294 = vld [vmem:[%s2] sm:$0xff]
    %v295 = vld [vmem:[#allocation5] sm:$0xff]
    %v296 = vld [vmem:[#allocation5 + $0x8] sm:$0xff]
    %v297 = vld [vmem:[#allocation5 + $0x10] sm:$0x1]
    %v298 = vld [vmem:[#allocation5 + $0x18] sm:$0x1]
    %299 = vrot.lane.b32.xlu0 %v290, 17
    %v300 = vpop.permute.xlu0 %299
    %301 = vrot.lane.b32.xlu0 %v292, 17
    %v302 = vpop.permute.xlu0 %301
    %303 = vrot.lane.b32.xlu0 %v291, 17
    %v304 = vpop.permute.xlu0 %303
    %305 = vrot.lane.b32.xlu0 %v293, 17
    %v306 = vpop.permute.xlu0 %305
    %v307 = vlaneseq
    %v308 = vand.u32 %v307, 127
    %vm309 = vcmp.lt.s32.totalorder %v308, 17
    %v310 = vsel %vm309, %v300, %v304
    %v311 = vsel %vm309, %v302, %v306
    %v312 = vsel %vm309, %v304, %v300
    %v313 = vsel %vm309, %v306, %v302
    %v314 = vlaneseq
    %v315 = vshrl.u32 %v314, 7
    %v316 = vsub.s32 0, %v315
    %v317 = vrot.slane %v295, %v316
    %v318 = vlaneseq
    %v319 = vshrl.u32 %v318, 7
    %v320 = vsub.s32 0, %v319
    %v321 = vrot.slane %v296, %v320
    %v322 = vmul.f32 %v312, %v317
    %v323 = vmul.f32 %v310, %v321
    %v324 = vmul.f32 %v313, %v317
    %v325 = vmul.f32 %v311, %v321
    %327 = vset.pattern.permute.xlu0 0
    %328 = vperm.xlu0 %327, %v294
    %v329 = vpop.permute.xlu0 %328
    %v331 = vmul.f32 %v322, %v329
    %v332 = vmul.f32 %v323, %v329
    %v333 = vmul.f32 %v324, %v329
    %v334 = vmul.f32 %v325, %v329
    %v335 = vadd.f32 %v331, 0.0
    %v336 = vadd.f32 %v332, 0.0
    %v337 = vadd.f32 %v333, 0.0
    %v338 = vadd.f32 %v334, 0.0
    %339 = vrot.lane.b32.xlu0 %v290, 16
    %v340 = vpop.permute.xlu0 %339
    %341 = vrot.lane.b32.xlu0 %v292, 16
    %v342 = vpop.permute.xlu0 %341
    %343 = vrot.lane.b32.xlu0 %v291, 16
    %v344 = vpop.permute.xlu0 %343
    %345 = vrot.lane.b32.xlu0 %v293, 16
    %v346 = vpop.permute.xlu0 %345
    %vm347 = vcmp.lt.s32.totalorder %v308, 16
    %v348 = vsel %vm347, %v340, %v344
    %v349 = vsel %vm347, %v342, %v346
    %v350 = vsel %vm347, %v344, %v340
    %v351 = vsel %vm347, %v346, %v342
    %v352 = vlaneseq
    %v353 = vshrl.u32 %v352, 7
    %v354 = vsub.s32 1, %v353
    %v355 = vrot.slane %v295, %v354
    %v356 = vlaneseq
    %v357 = vshrl.u32 %v356, 7
    %v358 = vsub.s32 1, %v357
    %v359 = vrot.slane %v296, %v358
    %v360 = vmul.f32 %v350, %v355
    %v361 = vmul.f32 %v348, %v359
    %v362 = vmul.f32 %v351, %v355
    %v363 = vmul.f32 %v349, %v359
    %364 = vset.pattern.permute.xlu0 1
    %365 = vperm.xlu0 %364, %v294
    %v366 = vpop.permute.xlu0 %365
    %v368 = vmul.f32 %v360, %v366
    %v369 = vmul.f32 %v361, %v366
    %v370 = vmul.f32 %v362, %v366
    %v371 = vmul.f32 %v363, %v366
    %v372 = vadd.f32 %v335, %v368
    %v373 = vadd.f32 %v336, %v369
    %v374 = vadd.f32 %v337, %v370
    %v375 = vadd.f32 %v338, %v371
    %376 = vrot.lane.b32.xlu0 %v290, 15
    %v377 = vpop.permute.xlu0 %376
    %378 = vrot.lane.b32.xlu0 %v292, 15
    %v379 = vpop.permute.xlu0 %378
    %380 = vrot.lane.b32.xlu0 %v291, 15
    %v381 = vpop.permute.xlu0 %380
    %382 = vrot.lane.b32.xlu0 %v293, 15
    %v383 = vpop.permute.xlu0 %382
    %vm384 = vcmp.lt.s32.totalorder %v308, 15
    %v385 = vsel %vm384, %v377, %v381
    %v386 = vsel %vm384, %v379, %v383
    %v387 = vsel %vm384, %v381, %v377
    %v388 = vsel %vm384, %v383, %v379
    %v389 = vlaneseq
    %v390 = vshrl.u32 %v389, 7
    %v391 = vsub.s32 2, %v390
    %v392 = vrot.slane %v295, %v391
    %v393 = vlaneseq
    %v394 = vshrl.u32 %v393, 7
    %v395 = vsub.s32 2, %v394
    %v396 = vrot.slane %v296, %v395
    %v397 = vmul.f32 %v387, %v392
    %v398 = vmul.f32 %v385, %v396
    %v399 = vmul.f32 %v388, %v392
    %v400 = vmul.f32 %v386, %v396
    %401 = vset.pattern.permute.xlu0 2
    %402 = vperm.xlu0 %401, %v294
    %v403 = vpop.permute.xlu0 %402
    %v405 = vmul.f32 %v397, %v403
    %v406 = vmul.f32 %v398, %v403
    %v407 = vmul.f32 %v399, %v403
    %v408 = vmul.f32 %v400, %v403
    %v409 = vadd.f32 %v372, %v405
    %v410 = vadd.f32 %v373, %v406
    %v411 = vadd.f32 %v374, %v407
    %v412 = vadd.f32 %v375, %v408
    %413 = vrot.lane.b32.xlu0 %v290, 1
    %v414 = vpop.permute.xlu0 %413
    %415 = vrot.lane.b32.xlu0 %v292, 1
    %v416 = vpop.permute.xlu0 %415
    %417 = vrot.lane.b32.xlu0 %v291, 1
    %v418 = vpop.permute.xlu0 %417
    %419 = vrot.lane.b32.xlu0 %v293, 1
    %v420 = vpop.permute.xlu0 %419
    %vm421 = vcmp.lt.s32.totalorder %v308, 1
    %v422 = vsel %vm421, %v414, %v418
    %v423 = vsel %vm421, %v416, %v420
    %v424 = vsel %vm421, %v418, %v414
    %v425 = vsel %vm421, %v420, %v416
    %v426 = vlaneseq
    %v427 = vshrl.u32 %v426, 7
    %v428 = vsub.s32 3, %v427
    %v429 = vrot.slane %v295, %v428
    %v430 = vlaneseq
    %v431 = vshrl.u32 %v430, 7
    %v432 = vsub.s32 3, %v431
    %v433 = vrot.slane %v296, %v432
    %v434 = vmul.f32 %v424, %v429
    %v435 = vmul.f32 %v422, %v433
    %v436 = vmul.f32 %v425, %v429
    %v437 = vmul.f32 %v423, %v433
    %438 = vset.pattern.permute.xlu0 3
    %439 = vperm.xlu0 %438, %v294
    %v440 = vpop.permute.xlu0 %439
    %v442 = vmul.f32 %v434, %v440
    %v443 = vmul.f32 %v435, %v440
    %v444 = vmul.f32 %v436, %v440
    %v445 = vmul.f32 %v437, %v440
    %v446 = vadd.f32 %v409, %v442
    %v447 = vadd.f32 %v410, %v443
    %v448 = vadd.f32 %v411, %v444
    %v449 = vadd.f32 %v412, %v445
    %450 = vset.pattern.permute.xlu0 4
    %451 = vperm.xlu0 %450, %v294
    %v452 = vpop.permute.xlu0 %451
    %v454 = vmul.f32 %v290, %v452
    %v455 = vmul.f32 %v291, %v452
    %v456 = vmul.f32 %v292, %v452
    %v457 = vmul.f32 %v293, %v452
    %v458 = vadd.f32 %v446, %v454
    %v459 = vadd.f32 %v447, %v455
    %v460 = vadd.f32 %v448, %v456
    %v461 = vadd.f32 %v449, %v457
    %462 = vrot.lane.b32.xlu0 %v290, 127
    %v463 = vpop.permute.xlu0 %462
    %464 = vrot.lane.b32.xlu0 %v292, 127
    %v465 = vpop.permute.xlu0 %464
    %466 = vrot.lane.b32.xlu0 %v291, 127
    %v467 = vpop.permute.xlu0 %466
    %468 = vrot.lane.b32.xlu0 %v293, 127
    %v469 = vpop.permute.xlu0 %468
    %vm470 = vcmp.lt.s32.totalorder %v308, 127
    %v471 = vsel %vm470, %v463, %v467
    %v472 = vsel %vm470, %v465, %v469
    %v473 = vsel %vm470, %v467, %v463
    %v474 = vsel %vm470, %v469, %v465
    %v475 = vlaneseq
    %v476 = vshrl.u32 %v475, 7
    %v477 = vsub.s32 5, %v476
    %v478 = vrot.slane %v295, %v477
    %v479 = vlaneseq
    %v480 = vshrl.u32 %v479, 7
    %v481 = vsub.s32 5, %v480
    %v482 = vrot.slane %v296, %v481
    %v483 = vmul.f32 %v471, %v478
    %v484 = vmul.f32 %v473, %v482
    %v485 = vmul.f32 %v472, %v478
    %v486 = vmul.f32 %v474, %v482
    %487 = vset.pattern.permute.xlu0 5
    %488 = vperm.xlu0 %487, %v294
    %v489 = vpop.permute.xlu0 %488
    %v491 = vmul.f32 %v483, %v489
    %v492 = vmul.f32 %v484, %v489
    %v493 = vmul.f32 %v485, %v489
    %v494 = vmul.f32 %v486, %v489
    %v495 = vadd.f32 %v458, %v491
    %v496 = vadd.f32 %v459, %v492
    %v497 = vadd.f32 %v460, %v493
    %v498 = vadd.f32 %v461, %v494
    %499 = vrot.lane.b32.xlu0 %v290, 113
    %v500 = vpop.permute.xlu0 %499
    %501 = vrot.lane.b32.xlu0 %v292, 113
    %v502 = vpop.permute.xlu0 %501
    %503 = vrot.lane.b32.xlu0 %v291, 113
    %v504 = vpop.permute.xlu0 %503
    %505 = vrot.lane.b32.xlu0 %v293, 113
    %v506 = vpop.permute.xlu0 %505
    %vm507 = vcmp.lt.s32.totalorder %v308, 113
    %v508 = vsel %vm507, %v500, %v504
    %v509 = vsel %vm507, %v502, %v506
    %v510 = vsel %vm507, %v504, %v500
    %v511 = vsel %vm507, %v506, %v502
    %v512 = vlaneseq
    %v513 = vshrl.u32 %v512, 7
    %v514 = vsub.s32 6, %v513
    %v515 = vrot.slane %v295, %v514
    %v516 = vlaneseq
    %v517 = vshrl.u32 %v516, 7
    %v518 = vsub.s32 6, %v517
    %v519 = vrot.slane %v296, %v518
    %v520 = vmul.f32 %v508, %v515
    %v521 = vmul.f32 %v510, %v519
    %v522 = vmul.f32 %v509, %v515
    %v523 = vmul.f32 %v511, %v519
    %524 = vset.pattern.permute.xlu0 6
    %525 = vperm.xlu0 %524, %v294
    %v526 = vpop.permute.xlu0 %525
    %v528 = vmul.f32 %v520, %v526
    %v529 = vmul.f32 %v521, %v526
    %v530 = vmul.f32 %v522, %v526
    %v531 = vmul.f32 %v523, %v526
    %v532 = vadd.f32 %v495, %v528
    %v533 = vadd.f32 %v496, %v529
    %v534 = vadd.f32 %v497, %v530
    %v535 = vadd.f32 %v498, %v531
    %536 = vrot.lane.b32.xlu0 %v290, 112
    %v537 = vpop.permute.xlu0 %536
    %538 = vrot.lane.b32.xlu0 %v292, 112
    %v539 = vpop.permute.xlu0 %538
    %540 = vrot.lane.b32.xlu0 %v291, 112
    %v541 = vpop.permute.xlu0 %540
    %542 = vrot.lane.b32.xlu0 %v293, 112
    %v543 = vpop.permute.xlu0 %542
    %vm544 = vcmp.lt.s32.totalorder %v308, 112
    %v545 = vsel %vm544, %v537, %v541
    %v546 = vsel %vm544, %v539, %v543
    %v547 = vsel %vm544, %v541, %v537
    %v548 = vsel %vm544, %v543, %v539
    %v549 = vlaneseq
    %v550 = vshrl.u32 %v549, 7
    %v551 = vsub.s32 7, %v550
    %v552 = vrot.slane %v295, %v551
    %v553 = vlaneseq
    %v554 = vshrl.u32 %v553, 7
    %v555 = vsub.s32 7, %v554
    %v556 = vrot.slane %v296, %v555
    %v557 = vmul.f32 %v545, %v552
    %v558 = vmul.f32 %v547, %v556
    %v559 = vmul.f32 %v546, %v552
    %v560 = vmul.f32 %v548, %v556
    %561 = vset.pattern.permute.xlu0 7
    %562 = vperm.xlu0 %561, %v294
    %v563 = vpop.permute.xlu0 %562
    %v565 = vmul.f32 %v557, %v563
    %v566 = vmul.f32 %v558, %v563
    %v567 = vmul.f32 %v559, %v563
    %v568 = vmul.f32 %v560, %v563
    %v569 = vadd.f32 %v532, %v565
    %v570 = vadd.f32 %v533, %v566
    %v571 = vadd.f32 %v534, %v567
    %v572 = vadd.f32 %v535, %v568
    %573 = vrot.lane.b32.xlu0 %v290, 111
    %v574 = vpop.permute.xlu0 %573
    %575 = vrot.lane.b32.xlu0 %v292, 111
    %v576 = vpop.permute.xlu0 %575
    %577 = vrot.lane.b32.xlu0 %v291, 111
    %v578 = vpop.permute.xlu0 %577
    %579 = vrot.lane.b32.xlu0 %v293, 111
    %v580 = vpop.permute.xlu0 %579
    %vm581 = vcmp.lt.s32.totalorder %v308, 111
    %v582 = vsel %vm581, %v574, %v578
    %v583 = vsel %vm581, %v576, %v580
    %v584 = vsel %vm581, %v578, %v574
    %v585 = vsel %vm581, %v580, %v576
    %v586 = vlaneseq
    %v587 = vshrl.u32 %v586, 7
    %v588 = vsub.s32 0, %v587
    %v589 = vrot.slane %v297, %v588
    %v590 = vlaneseq
    %v591 = vshrl.u32 %v590, 7
    %v592 = vsub.s32 0, %v591
    %v593 = vrot.slane %v298, %v592
    %v594 = vmul.f32 %v582, %v589
    %v595 = vmul.f32 %v584, %v593
    %v596 = vmul.f32 %v583, %v589
    %v597 = vmul.f32 %v585, %v593
    %598 = vset.pattern.permute.xlu0 8
    %599 = vperm.xlu0 %598, %v294
    %v600 = vpop.permute.xlu0 %599
    %v602 = vmul.f32 %v594, %v600
    %v603 = vmul.f32 %v595, %v600
    %v604 = vmul.f32 %v596, %v600
    %v605 = vmul.f32 %v597, %v600
    %v606 = vadd.f32 %v569, %v602
    %v607 = vadd.f32 %v570, %v603
    %v608 = vadd.f32 %v571, %v604
    %v609 = vadd.f32 %v572, %v605
    %v610 = vadd.f32 %v606, %v607
    %611 = vadd.xlane.f32.xlu0 %v610
    %v612 = vpop.xlane.xlu0 %611
    %v613 = vadd.f32 %v608, %v609
    %614 = vadd.xlane.f32.xlu0 %v613
    %v615 = vpop.xlane.xlu0 %614
    %v616 = vmul.f32 %v612, %v249
    %v617 = vmul.f32 %v615, %v249
    %v618 = vmul.f32 %v606, %v606
    %v619 = vmul.f32 %v607, %v607
    %v620 = vmul.f32 %v608, %v608
    %v621 = vmul.f32 %v609, %v609
    %v622 = vadd.f32 %v618, %v619
    %623 = vadd.xlane.f32.xlu0 %v622
    %v624 = vpop.xlane.xlu0 %623
    %v625 = vadd.f32 %v620, %v621
    %626 = vadd.xlane.f32.xlu0 %v625
    %v627 = vpop.xlane.xlu0 %626
    %v628 = vmul.f32 %v624, %v249
    %v629 = vmul.f32 %v627, %v249
    %v630 = vmul.f32 %v616, %v616
    %v631 = vmul.f32 %v617, %v617
    %v632 = vsub.f32 %v628, %v630
    %v633 = vsub.f32 %v629, %v631
    %v634 = vmax.f32 %v632, 0.0
    %v635 = vmax.f32 %v633, 0.0
    %v636 = vsub.f32 %v606, %v616
    %v637 = vsub.f32 %v607, %v616
    %v638 = vsub.f32 %v608, %v617
    %v639 = vsub.f32 %v609, %v617
    %v640 = vadd.f32 %v634, 1e-05
    %v641 = vadd.f32 %v635, 1e-05
    %v642 = vrsqrt.pop %v640
    %v643 = vrsqrt.pop %v641
    %v644 = vmul.f32 %v636, %v642
    %v645 = vmul.f32 %v637, %v642
    %v646 = vmul.f32 %v638, %v643
    %v647 = vmul.f32 %v639, %v643
    %vm648 = vcmp.gt.f32.partialorder %v644, 0.0
    %vm649 = vcmp.gt.f32.partialorder %v645, 0.0
    %vm650 = vcmp.gt.f32.partialorder %v646, 0.0
    %vm651 = vcmp.gt.f32.partialorder %v647, 0.0
    %v652 = vmul.f32 %v644, 0.2
    %v653 = vmul.f32 %v645, 0.2
    %v654 = vmul.f32 %v646, 0.2
    %v655 = vmul.f32 %v647, 0.2
    %v656 = vsel %vm648, %v644, %v652
    %v657 = vsel %vm649, %v645, %v653
    %v658 = vsel %vm650, %v646, %v654
    %v659 = vsel %vm651, %v647, %v655
    %v660 = vld [vmem:[%s3] sm:$0xf]
    %662 = vset.pattern.permute.xlu0 0
    %663 = vperm.xlu0 %662, %v660
    %v664 = vpop.permute.xlu0 %663
    %v666 = vlaneseq
    %v667 = vshrl.u32 %v666, 7
    %v668 = vsub.s32 0, %v667
    %v669 = vrot.slane %v656, %v668
    %v670 = vlaneseq
    %v671 = vshrl.u32 %v670, 7
    %v672 = vsub.s32 0, %v671
    %v673 = vrot.slane %v657, %v672
    %v674 = vlaneseq
    %v675 = vshrl.u32 %v674, 7
    %v676 = vsub.s32 0, %v675
    %v677 = vrot.slane %v658, %v676
    %v678 = vlaneseq
    %v679 = vshrl.u32 %v678, 7
    %v680 = vsub.s32 0, %v679
    %v681 = vrot.slane %v659, %v680
    %v682 = vmul.f32 %v664, %v669
    %v683 = vmul.f32 %v664, %v673
    %v684 = vmul.f32 %v664, %v677
    %v685 = vmul.f32 %v664, %v681
    %686 = vset.pattern.permute.xlu0 1
    %687 = vperm.xlu0 %686, %v660
    %v688 = vpop.permute.xlu0 %687
    %v690 = vlaneseq
    %v691 = vshrl.u32 %v690, 7
    %v692 = vsub.s32 1, %v691
    %v693 = vrot.slane %v656, %v692
    %v694 = vlaneseq
    %v695 = vshrl.u32 %v694, 7
    %v696 = vsub.s32 1, %v695
    %v697 = vrot.slane %v657, %v696
    %v698 = vlaneseq
    %v699 = vshrl.u32 %v698, 7
    %v700 = vsub.s32 1, %v699
    %v701 = vrot.slane %v658, %v700
    %v702 = vlaneseq
    %v703 = vshrl.u32 %v702, 7
    %v704 = vsub.s32 1, %v703
    %v705 = vrot.slane %v659, %v704
    %v706 = vmul.f32 %v688, %v693
    %v707 = vmul.f32 %v688, %v697
    %v708 = vmul.f32 %v688, %v701
    %v709 = vmul.f32 %v688, %v705
    %v710 = vadd.f32 %v682, %v706
    %v711 = vadd.f32 %v683, %v707
    %v712 = vadd.f32 %v684, %v708
    %v713 = vadd.f32 %v685, %v709
    %714 = vset.pattern.permute.xlu0 2
    %715 = vperm.xlu0 %714, %v660
    %v716 = vpop.permute.xlu0 %715
    %v718 = vlaneseq
    %v719 = vshrl.u32 %v718, 7
    %v720 = vsub.s32 2, %v719
    %v721 = vrot.slane %v656, %v720
    %v722 = vlaneseq
    %v723 = vshrl.u32 %v722, 7
    %v724 = vsub.s32 2, %v723
    %v725 = vrot.slane %v657, %v724
    %v726 = vlaneseq
    %v727 = vshrl.u32 %v726, 7
    %v728 = vsub.s32 2, %v727
    %v729 = vrot.slane %v658, %v728
    %v730 = vlaneseq
    %v731 = vshrl.u32 %v730, 7
    %v732 = vsub.s32 2, %v731
    %v733 = vrot.slane %v659, %v732
    %v734 = vmul.f32 %v716, %v721
    %v735 = vmul.f32 %v716, %v725
    %v736 = vmul.f32 %v716, %v729
    %v737 = vmul.f32 %v716, %v733
    %v738 = vadd.f32 %v710, %v734
    %v739 = vadd.f32 %v711, %v735
    %v740 = vadd.f32 %v712, %v736
    %v741 = vadd.f32 %v713, %v737
    %742 = vset.pattern.permute.xlu0 3
    %743 = vperm.xlu0 %742, %v660
    %v744 = vpop.permute.xlu0 %743
    %v746 = vlaneseq
    %v747 = vshrl.u32 %v746, 7
    %v748 = vsub.s32 3, %v747
    %v749 = vrot.slane %v656, %v748
    %v750 = vlaneseq
    %v751 = vshrl.u32 %v750, 7
    %v752 = vsub.s32 3, %v751
    %v753 = vrot.slane %v657, %v752
    %v754 = vlaneseq
    %v755 = vshrl.u32 %v754, 7
    %v756 = vsub.s32 3, %v755
    %v757 = vrot.slane %v658, %v756
    %v758 = vlaneseq
    %v759 = vshrl.u32 %v758, 7
    %v760 = vsub.s32 3, %v759
    %v761 = vrot.slane %v659, %v760
    %v762 = vmul.f32 %v744, %v749
    %v763 = vmul.f32 %v744, %v753
    %v764 = vmul.f32 %v744, %v757
    %v765 = vmul.f32 %v744, %v761
    %v766 = vadd.f32 %v738, %v762
    %v767 = vadd.f32 %v739, %v763
    %v768 = vadd.f32 %v740, %v764
    %v769 = vadd.f32 %v741, %v765
    %770 = vset.pattern.permute.xlu0 4
    %771 = vperm.xlu0 %770, %v660
    %v772 = vpop.permute.xlu0 %771
    %v774 = vlaneseq
    %v775 = vshrl.u32 %v774, 7
    %v776 = vsub.s32 4, %v775
    %v777 = vrot.slane %v656, %v776
    %v778 = vlaneseq
    %v779 = vshrl.u32 %v778, 7
    %v780 = vsub.s32 4, %v779
    %v781 = vrot.slane %v657, %v780
    %v782 = vlaneseq
    %v783 = vshrl.u32 %v782, 7
    %v784 = vsub.s32 4, %v783
    %v785 = vrot.slane %v658, %v784
    %v786 = vlaneseq
    %v787 = vshrl.u32 %v786, 7
    %v788 = vsub.s32 4, %v787
    %v789 = vrot.slane %v659, %v788
    %v790 = vmul.f32 %v772, %v777
    %v791 = vmul.f32 %v772, %v781
    %v792 = vmul.f32 %v772, %v785
    %v793 = vmul.f32 %v772, %v789
    %v794 = vadd.f32 %v766, %v790
    %v795 = vadd.f32 %v767, %v791
    %v796 = vadd.f32 %v768, %v792
    %v797 = vadd.f32 %v769, %v793
    %798 = vset.pattern.permute.xlu0 5
    %799 = vperm.xlu0 %798, %v660
    %v800 = vpop.permute.xlu0 %799
    %v802 = vlaneseq
    %v803 = vshrl.u32 %v802, 7
    %v804 = vsub.s32 5, %v803
    %v805 = vrot.slane %v656, %v804
    %v806 = vlaneseq
    %v807 = vshrl.u32 %v806, 7
    %v808 = vsub.s32 5, %v807
    %v809 = vrot.slane %v657, %v808
    %v810 = vlaneseq
    %v811 = vshrl.u32 %v810, 7
    %v812 = vsub.s32 5, %v811
    %v813 = vrot.slane %v658, %v812
    %v814 = vlaneseq
    %v815 = vshrl.u32 %v814, 7
    %v816 = vsub.s32 5, %v815
    %v817 = vrot.slane %v659, %v816
    %v818 = vmul.f32 %v800, %v805
    %v819 = vmul.f32 %v800, %v809
    %v820 = vmul.f32 %v800, %v813
    %v821 = vmul.f32 %v800, %v817
    %v822 = vadd.f32 %v794, %v818
    %v823 = vadd.f32 %v795, %v819
    %v824 = vadd.f32 %v796, %v820
    %v825 = vadd.f32 %v797, %v821
    %826 = vset.pattern.permute.xlu0 6
    %827 = vperm.xlu0 %826, %v660
    %v828 = vpop.permute.xlu0 %827
    %v830 = vlaneseq
    %v831 = vshrl.u32 %v830, 7
    %v832 = vsub.s32 6, %v831
    %v833 = vrot.slane %v656, %v832
    %v834 = vlaneseq
    %v835 = vshrl.u32 %v834, 7
    %v836 = vsub.s32 6, %v835
    %v837 = vrot.slane %v657, %v836
    %v838 = vlaneseq
    %v839 = vshrl.u32 %v838, 7
    %v840 = vsub.s32 6, %v839
    %v841 = vrot.slane %v658, %v840
    %v842 = vlaneseq
    %v843 = vshrl.u32 %v842, 7
    %v844 = vsub.s32 6, %v843
    %v845 = vrot.slane %v659, %v844
    %v846 = vmul.f32 %v828, %v833
    %v847 = vmul.f32 %v828, %v837
    %v848 = vmul.f32 %v828, %v841
    %v849 = vmul.f32 %v828, %v845
    %v850 = vadd.f32 %v822, %v846
    %v851 = vadd.f32 %v823, %v847
    %v852 = vadd.f32 %v824, %v848
    %v853 = vadd.f32 %v825, %v849
    %854 = vset.pattern.permute.xlu0 7
    %855 = vperm.xlu0 %854, %v660
    %v856 = vpop.permute.xlu0 %855
    %v858 = vlaneseq
    %v859 = vshrl.u32 %v858, 7
    %v860 = vsub.s32 7, %v859
    %v861 = vrot.slane %v656, %v860
    %v862 = vlaneseq
    %v863 = vshrl.u32 %v862, 7
    %v864 = vsub.s32 7, %v863
    %v865 = vrot.slane %v657, %v864
    %v866 = vlaneseq
    %v867 = vshrl.u32 %v866, 7
    %v868 = vsub.s32 7, %v867
    %v869 = vrot.slane %v658, %v868
    %v870 = vlaneseq
    %v871 = vshrl.u32 %v870, 7
    %v872 = vsub.s32 7, %v871
    %v873 = vrot.slane %v659, %v872
    %v874 = vmul.f32 %v856, %v861
    %v875 = vmul.f32 %v856, %v865
    %v876 = vmul.f32 %v856, %v869
    %v877 = vmul.f32 %v856, %v873
    %v878 = vadd.f32 %v850, %v874
    %v879 = vadd.f32 %v851, %v875
    %v880 = vadd.f32 %v852, %v876
    %v881 = vadd.f32 %v853, %v877
    %vm882 = vcmask 1043456
    %v883 = vsel %vm882, %v878, 0.0
    %v884 = vsel %vm882, %v879, 0.0
    %v885 = vadd.f32 %v883, %v884
    %886 = vadd.xlane.f32.xlu0 %v885
    %v887 = vpop.xlane.xlu0 %886
    %v888 = vsel %vm882, %v880, 0.0
    %v889 = vsel %vm882, %v881, 0.0
    %v890 = vadd.f32 %v888, %v889
    %891 = vadd.xlane.f32.xlu0 %v890
    %v892 = vpop.xlane.xlu0 %891
    %v893 = vmul.f32 %v887, %v249
    %v894 = vmul.f32 %v892, %v249
    %v895 = vmul.f32 %v878, %v878
    %v896 = vmul.f32 %v879, %v879
    %v897 = vmul.f32 %v880, %v880
    %v898 = vmul.f32 %v881, %v881
    %v899 = vsel %vm882, %v895, 0.0
    %v900 = vsel %vm882, %v896, 0.0
    %v901 = vadd.f32 %v899, %v900
    %902 = vadd.xlane.f32.xlu0 %v901
    %v903 = vpop.xlane.xlu0 %902
    %v904 = vsel %vm882, %v897, 0.0
    %v905 = vsel %vm882, %v898, 0.0
    %v906 = vadd.f32 %v904, %v905
    %907 = vadd.xlane.f32.xlu0 %v906
    %v908 = vpop.xlane.xlu0 %907
    %v909 = vmul.f32 %v903, %v249
    %v910 = vmul.f32 %v908, %v249
    %v911 = vmul.f32 %v893, %v893
    %v912 = vmul.f32 %v894, %v894
    %v913 = vsub.f32 %v909, %v911
    %v914 = vsub.f32 %v910, %v912
    %v915 = vmax.f32 %v913, 0.0
    %v916 = vmax.f32 %v914, 0.0
    %v917 = vsub.f32 %v878, %v893
    %v918 = vsub.f32 %v879, %v893
    %v919 = vsub.f32 %v880, %v894
    %v920 = vsub.f32 %v881, %v894
    %v921 = vadd.f32 %v915, 1e-05
    %v922 = vadd.f32 %v916, 1e-05
    %v923 = vrsqrt.pop %v921
    %v924 = vrsqrt.pop %v922
    %v925 = vmul.f32 %v917, %v923
    %v926 = vmul.f32 %v918, %v923
    %v927 = vmul.f32 %v919, %v924
    %v928 = vmul.f32 %v920, %v924
    %v929 = vcombine.high %v49, %v49
    %v930 = vcombine.high %v50, %v50
    %v933 = vadd.f32 %v925, %v49
    %v934 = vadd.f32 %v926, %v929
    %v935 = vadd.f32 %v927, %v50
    %v936 = vadd.f32 %v928, %v930
    %v941 = vcombine.low %v933, %v934
    %v942 = vcombine.low %v935, %v936
    %945 = vst [vmem:[#allocation7] sm:$0xff] %v941
    %946 = vst [vmem:[#allocation7 + $0x8] sm:$0xff] %v942
    // Predicated region
    $region30: #{tpu_custom_call.1} parent=1 // pred_check
      _
    $region31: #{tpu_custom_call.1} parent=1 // pred_check_branch
      %948 = sbr.rel (0) target = $region33
    $region32: #{tpu_custom_call.1} parent=1 // pred_region
      %s950 = ssub.s32 256, 256
      %951 = vsyncadd [#allocation4], %s950
      %s952 = sshll.u32 [#allocation7], 4
      %s953 = int_to_ptr.vmem [resolvable:$true] %s952
      %958 = dma.vmem_to_hbm [thread:$0]  %s953, 256, %s5, [#allocation4], 128, 128, 8
    $region33: #{tpu_custom_call.1} parent=1 // pred_fallthru
      _
    // Predicated region
    $region34: #{tpu_custom_call.1} parent=1 // pred_check
      _
    $region35: #{tpu_custom_call.1} parent=1 // pred_check_branch
      %960 = sbr.rel (0) target = $region37
    $region36: #{tpu_custom_call.1} parent=1 // pred_region
      %961 = dma.done [#allocation4], 256
    $region37: #{tpu_custom_call.1} parent=1 // pred_fallthru
      _
    %962 = vsyncpa [#allocation3], 1
    %963 = vsyncpa [#allocation6], 1
    %964 = vsyncpa [#allocation4], 1

</llo_original>
